<compile_context>
chip_gen: v7x
topology: tpu7x:2x2x1
jax: 0.10.0
libtpu: 0.0.40
codegen_flags: <defaults>
</compile_context>

<pallas_src>
import jax
import jax.numpy as jnp
from jax.experimental import pallas as pl
from jax.experimental.pallas import tpu as pltpu

MAX_ROWS_PER_STEP = 1024   # output rows gathered per grid step (multiple of 8)
MAX_IN_FLIGHT = 16         # outstanding row DMAs (sliding window)


def _gather_kernel(ids_ref, kv_ref, out_ref, sem):
    """out[r, :] = kv[0, ids[base + r], :] via per-row HBM->VMEM DMA copies."""
    tq = out_ref.shape[0]
    base = pl.program_id(0) * tq
    window = min(tq, MAX_IN_FLIGHT)

    def row_copy(r):
        row = ids_ref[base + r]                        # scalar id from SMEM
        return pltpu.make_async_copy(
            kv_ref.at[0, pl.ds(row, 1), :],            # (1, D) embedding-slot row in HBM
            out_ref.at[pl.ds(r, 1), :],                # (1, D) destination row in VMEM
            sem,
        )

    # Prologue: put `window` row copies in flight.
    @pl.loop(0, window)
    def _(r):
        row_copy(r).start()

    # Steady state: keep the window full, retire one copy per iteration.
    # A single shared DMA semaphore is enough: we only need *all* rows to have
    # landed by the end of the body, so completion order does not matter.
    @pl.loop(0, tq)
    def _(r):
        @pl.when(r + window < tq)
        def _():
            row_copy(r + window).start()
        row_copy(r).wait()


def ps_embedding_forward(ids: jax.Array, kv_store: jax.Array) -> jax.Array:
    """Pallas equivalent of PSEmbedding.forward.

    ids:      integer array, any shape, values in [0, num_embeddings).
    kv_store: (2, num_embeddings, embedding_dim) f32 parameter-server values;
              kv_store[0] = embeddings, kv_store[1] = optimizer accumulators.
    returns:  ids.shape + (embedding_dim,) f32 gathered embedding rows (bit-exact).
    """
    two, num_embeddings, emb_dim = kv_store.shape
    assert two == 2

    ids_flat = ids.reshape(-1).astype(jnp.int32)
    n = ids_flat.shape[0]

    # Row-tile size: as large as possible (amortizes the ~0.35 us per-step cost),
    # a multiple of 8 sublanes, and capped so the double-buffered output tile
    # stays within ~8 MiB of VMEM for any embedding_dim.
    n8 = ((n + 7) // 8) * 8
    rows_cap = max(8, ((4 << 20) // (emb_dim * 4)) // 8 * 8)
    tq = min(MAX_ROWS_PER_STEP, n8, rows_cap)
    n_pad = ((n + tq - 1) // tq) * tq
    if n_pad != n:
        # Padded ids gather row 0; the padded output rows are dropped below.
        ids_flat = jnp.pad(ids_flat, (0, n_pad - n))

    out = pl.pallas_call(
        _gather_kernel,
        out_shape=jax.ShapeDtypeStruct((n_pad, emb_dim), jnp.float32),
        grid_spec=pltpu.PrefetchScalarGridSpec(
            num_scalar_prefetch=1,                           # ids -> SMEM
            grid=(n_pad // tq,),
            in_specs=[pl.BlockSpec(memory_space=pl.ANY)],    # kv store stays in HBM
            out_specs=pl.BlockSpec((tq, emb_dim), lambda i, ids: (i, 0)),
            scratch_shapes=[pltpu.SemaphoreType.DMA(())],
        ),
        compiler_params=pltpu.CompilerParams(
            dimension_semantics=("parallel",),               # both TCs on v7x
        ),
    )(ids_flat, kv_store)

    if n_pad != n:
        out = out[:n]
    return out.reshape(ids.shape + (emb_dim,))


def make_kv_store(key, num_embeddings: int, embedding_dim: int) -> jax.Array:
    """Deterministic init matching PSEmbedding.kv_init:
    slot 0 (embeddings) xavier_uniform_, slot 1 (accumulators) zeros (no optimizer)."""
    bound = (6.0 / (num_embeddings + embedding_dim)) ** 0.5
    emb = jax.random.uniform(
        key, (num_embeddings, embedding_dim), jnp.float32, minval=-bound, maxval=bound
    )
    acc = jnp.zeros((num_embeddings, embedding_dim), jnp.float32)
    return jnp.stack([emb, acc], axis=0)        # (2, num_embeddings, embedding_dim)


if __name__ == "__main__":
    num_embeddings = 64
    embedding_dim = 128
    batch, seq = 2, 8

    root = jax.random.PRNGKey(0)
    k_table, k_ids = jax.random.split(root)

    kv_store = make_kv_store(k_table, num_embeddings, embedding_dim)
    ids = jax.random.randint(k_ids, (batch, seq), 0, num_embeddings, dtype=jnp.int32)

    out = ps_embedding_forward(ids, kv_store)
    out = jax.block_until_ready(out)

    # Reference: plain-JAX gather of the embedding slot.  DMA copies are bit-exact.
    ref = kv_store[0][ids]
    assert out.shape == (batch, seq, embedding_dim)
    assert out.dtype == jnp.float32
    assert bool(jnp.array_equal(out, ref)), float(jnp.max(jnp.abs(out - ref)))

    print("KERNEL_OK")
</pallas_src>

<mosaic_0001>
module attributes {stable_mosaic.version = 11 : i64} {
  func.func @_gather_kernel(%arg0: i32, %arg1: memref<16xi32, #tpu.memory_space<smem>>, %arg2: memref<2x64x128xf32, #tpu.memory_space<any>>, %arg3: memref<16x128xf32, #tpu.memory_space<vmem>>, %arg4: memref<!tpu.dma_semaphore, #tpu.memory_space<semaphore_mem>>) attributes {dimension_semantics = [#tpu.dimension_semantics<parallel>], iteration_bounds = array<i64: 1>, scalar_prefetch = 1 : i64, scratch_operands = 1 : i64, tpu.core_type = #tpu.core_type<tc>, window_params = [{}, {transform_indices = @transform_1, window_bounds = array<i64: 16, 128>}]} {
    %c16_i32 = arith.constant 16 : i32
    %0 = arith.muli %arg0, %c16_i32 : i32
    %c0_i32 = arith.constant 0 : i32
    %c16_i32_0 = arith.constant 16 : i32
    %1 = arith.addi %c0_i32, %c16_i32_0 : i32
    %c1_i32 = arith.constant 1 : i32
    scf.for %arg5 = %c0_i32 to %1 step %c1_i32  : i32 {
      %c1_i32_6 = arith.constant 1 : i32
      %3 = arith.muli %arg5, %c1_i32_6 : i32
      %c0_i32_7 = arith.constant 0 : i32
      %4 = arith.addi %c0_i32_7, %3 : i32
      %5 = arith.addi %0, %4 : i32
      %6 = arith.index_cast %5 : i32 to index
      %7 = memref.load %arg1[%6] : memref<16xi32, #tpu.memory_space<smem>>
      %c0_i32_8 = arith.constant 0 : i32
      %c0_i32_9 = arith.constant 0 : i32
      %8 = tpu.memref_slice %arg2[%c0_i32_8, %7, %c0_i32_9] : memref<2x64x128xf32, #tpu.memory_space<any>> -> memref<1x1x128xf32, #tpu.memory_space<any>>
      %9 = tpu.memref_squeeze %8 : memref<1x1x128xf32, #tpu.memory_space<any>> -> memref<1x128xf32, #tpu.memory_space<any>>
      %c0_i32_10 = arith.constant 0 : i32
      %10 = tpu.memref_slice %arg3[%4, %c0_i32_10] : memref<16x128xf32, #tpu.memory_space<vmem>> -> memref<1x128xf32, #tpu.memory_space<vmem>>
      tpu.enqueue_dma source(%9 : memref<1x128xf32, #tpu.memory_space<any>>) target(%10 : memref<1x128xf32, #tpu.memory_space<vmem>>) target_semaphore(%arg4 : memref<!tpu.dma_semaphore, #tpu.memory_space<semaphore_mem>>)
    }
    %c16_i32_1 = arith.constant 16 : i32
    %c0_i32_2 = arith.constant 0 : i32
    %c16_i32_3 = arith.constant 16 : i32
    %2 = arith.addi %c0_i32_2, %c16_i32_3 : i32
    %c1_i32_4 = arith.constant 1 : i32
    scf.for %arg5 = %c0_i32_2 to %2 step %c1_i32_4  : i32 {
      %c1_i32_6 = arith.constant 1 : i32
      %3 = arith.muli %arg5, %c1_i32_6 : i32
      %c0_i32_7 = arith.constant 0 : i32
      %4 = arith.addi %c0_i32_7, %3 : i32
      %c16_i32_8 = arith.constant 16 : i32
      %5 = arith.addi %4, %c16_i32_8 : i32
      %c16_i32_9 = arith.constant 16 : i32
      %6 = arith.cmpi slt, %5, %c16_i32_9 : i32
      %7 = arith.extui %6 : i1 to i32
      %c0_i32_10 = arith.constant 0 : i32
      %8 = arith.cmpi ne, %7, %c0_i32_10 : i32
      scf.if %8 {
        %c16_i32_14 = arith.constant 16 : i32
        %15 = arith.addi %4, %c16_i32_14 : i32
        %16 = arith.addi %0, %15 : i32
        %17 = arith.index_cast %16 : i32 to index
        %18 = memref.load %arg1[%17] : memref<16xi32, #tpu.memory_space<smem>>
        %c0_i32_15 = arith.constant 0 : i32
        %c0_i32_16 = arith.constant 0 : i32
        %19 = tpu.memref_slice %arg2[%c0_i32_15, %18, %c0_i32_16] : memref<2x64x128xf32, #tpu.memory_space<any>> -> memref<1x1x128xf32, #tpu.memory_space<any>>
        %20 = tpu.memref_squeeze %19 : memref<1x1x128xf32, #tpu.memory_space<any>> -> memref<1x128xf32, #tpu.memory_space<any>>
        %c0_i32_17 = arith.constant 0 : i32
        %21 = tpu.memref_slice %arg3[%15, %c0_i32_17] : memref<16x128xf32, #tpu.memory_space<vmem>> -> memref<1x128xf32, #tpu.memory_space<vmem>>
        tpu.enqueue_dma source(%20 : memref<1x128xf32, #tpu.memory_space<any>>) target(%21 : memref<1x128xf32, #tpu.memory_space<vmem>>) target_semaphore(%arg4 : memref<!tpu.dma_semaphore, #tpu.memory_space<semaphore_mem>>)
      } else {
      }
      %9 = arith.addi %0, %4 : i32
      %10 = arith.index_cast %9 : i32 to index
      %11 = memref.load %arg1[%10] : memref<16xi32, #tpu.memory_space<smem>>
      %c0_i32_11 = arith.constant 0 : i32
      %c0_i32_12 = arith.constant 0 : i32
      %12 = tpu.memref_slice %arg2[%c0_i32_11, %11, %c0_i32_12] : memref<2x64x128xf32, #tpu.memory_space<any>> -> memref<1x1x128xf32, #tpu.memory_space<any>>
      %13 = tpu.memref_squeeze %12 : memref<1x1x128xf32, #tpu.memory_space<any>> -> memref<1x128xf32, #tpu.memory_space<any>>
      %c0_i32_13 = arith.constant 0 : i32
      %14 = tpu.memref_slice %arg3[%4, %c0_i32_13] : memref<16x128xf32, #tpu.memory_space<vmem>> -> memref<1x128xf32, #tpu.memory_space<vmem>>
      tpu.wait_dma2 semaphore(%arg4 : memref<!tpu.dma_semaphore, #tpu.memory_space<semaphore_mem>>) src(%13 : memref<1x128xf32, #tpu.memory_space<any>>) dst(%14 : memref<1x128xf32, #tpu.memory_space<vmem>>)
    }
    %c16_i32_5 = arith.constant 16 : i32
    return
  }
  func.func @transform_1(%arg0: i32, %arg1: memref<16xi32, #tpu.memory_space<smem>>) -> (i32, i32) {
    %c0_i32 = arith.constant 0 : i32
    %c0_i32_0 = arith.constant 0 : i32
    return %arg0, %c0_i32 : i32, i32
  }
}

</mosaic_0001>

<llo_original>
// kernel: tpu_custom_call.1
$region0: #{tpu_custom_call.1}
  #allocation0 [shape = 'u32[]', space=smem, size = 0x4, offset = 0x4, fixed_abs, tag = 'smem constant byte address 0x4 - core index']
  #allocation1 [shape = 'u32[144,128]{1,0:T(1,128)}', space=vmem, size = 0x12000, scoped, tag = 'internal scratch']
  #allocation2 [shape = 's32[1]{0}', space=sflag, size = 0x4, scoped, tag = 'scratch operand']
  #allocation3 [shape = 's32[1]{0}', space=sflag, size = 0x4, scoped, tag = 'scoped memory for tpu_custom_call.1']
  #allocation4 [shape = 'u8[512]{0}', space=smem, size = 0x200, scoped, tag = 'prefetched SMEM operand 0']
  #allocation7 [shape = 's32[]', space=sflag, size = 0x4, offset = 0, fixed_abs, tag = 'sflag constant byte address 0x0 - dummy sync flag']
  #allocation8 [shape = 's32[]', space=sflag, size = 0x4, offset = 0, fixed_abs, tag = 'sflag constant byte address 0x0 - dummy sync flag']
  #allocation9 [shape = 'u32[]', space=smem, size = 0x4, offset = 0x44, fixed_abs, tag = 'smem constant byte address 0x44 - assertion arg 0']
  #allocation10 [shape = 'u32[]', space=smem, size = 0x4, offset = 0x48, fixed_abs, tag = 'smem constant byte address 0x48 - assertion arg 1']
  #allocation11 [shape = 's32[]', space=sflag, size = 0x4, offset = 0, fixed_abs, tag = 'sflag constant byte address 0x0 - dummy sync flag']
  #allocation12 [shape = 's32[]', space=sflag, size = 0x4, offset = 0, fixed_abs, tag = 'sflag constant byte address 0x0 - dummy sync flag']
  %s0 = inlined_call_operand.hbm [shape: s32[16], index: 0, kind: input, shape index: {}]
  %s1 = inlined_call_operand.hbm [shape: f32[2,64,128], index: 1, kind: input, shape index: {}]
  %s2 = inlined_call_operand.hbm [shape: f32[16,128], index: 2, kind: output, shape index: {}]
  %s3 = sld [smem:[#allocation0]]
  $region36: #{tpu_custom_call.1} parent=0
    _
  %s5 = ssub.s32 1, %s3
  %s6 = scalar_select 0, %s5, %s3
  %8 = dma.hbm_to_smem %s0, 16, [#allocation4], [#allocation3]
  %9 = dma.done [#allocation3], 16
  %10 = sfence
  $region1: #{tpu_custom_call.1} parent=0
    #allocation5 [shape = 'u8[8192]{0}', space=vmem, size = 0x2000, scoped, tag = 'output window, operand 0, single buffered']
    #allocation6 [shape = 's32[1]{0}', space=sflag, size = 0x4, scoped, tag = 'scoped memory for tpu_custom_call.1']
    %11 = vsyncpa [#allocation6], 0
    %s12 = smul.u32 0, 16
    loop: start=0, step=1, limit=16
    $region2: #{tpu_custom_call.1} parent=1 // loop_pre_header
      _
    $region3: #{tpu_custom_call.1} parent=1 // loop_header
      %s14 = sphi 0, %s18
      %p15 = scmp.ge.s32.totalorder %s14, 16
    $region4: #{tpu_custom_call.1} parent=1 // loop_header_branch
      %17 = sbr.rel (%p15) target = $region8
    $region5: #{tpu_custom_call.1} parent=1 // loop_body
      %s19 = sadd.s32 %s12, %s14
      %s20 = sld [smem:[#allocation4 + %s19]]
      %s21 = smul.addr %s20, 16
      %s22 = scalar_lea.hbm %s1, %s21
      %s23 = scalar_lea.vmem [#allocation5], %s14
      // Predicated region
      $region9: #{tpu_custom_call.1} parent=5 // pred_check
        _
      $region10: #{tpu_custom_call.1} parent=5 // pred_check_branch
        %25 = sbr.rel target = $region12
      $region11: #{tpu_custom_call.1} parent=5 // pred_region
        %26 = sst [smem:[#allocation9]] [#allocation8]
        %27 = sst [smem:[#allocation10]] [#allocation7]
      $region12: #{tpu_custom_call.1} parent=5 // pred_fallthru
        _
      %29 = shalt.err (0)
      %s31 = sshll.u32 %s23, 4
      %s32 = int_to_ptr.vmem [resolvable:$true] %s31
      %34 = dma.hbm_to_vmem [thread:$0]  %s22, 16, %s32, [#allocation2]
    $region6: #{tpu_custom_call.1} parent=1 // loop_footer
      %s18 = sadd.s32 1, %s14
    $region7: #{tpu_custom_call.1} parent=1 // loop_footer_branch
      %13 = sbr.rel target = $region3
    $region8: #{tpu_custom_call.1} parent=1 // loop_exit
      _
    loop: start=0, step=1, limit=16
    $region13: #{tpu_custom_call.1} parent=1 // loop_pre_header
      _
    $region14: #{tpu_custom_call.1} parent=1 // loop_header
      %s36 = sphi 0, %s40
      %p37 = scmp.ge.s32.totalorder %s36, 16
    $region15: #{tpu_custom_call.1} parent=1 // loop_header_branch
      %39 = sbr.rel (%p37) target = $region19
    $region16: #{tpu_custom_call.1} parent=1 // loop_body
      %s41 = sadd.s32 %s36, 16
      %p42 = scmp.lt.s32.totalorder %s41, 16
      // Predicated region
      $region20: #{tpu_custom_call.1} parent=16 // pred_check
        %p43 = pneg %p42
      $region21: #{tpu_custom_call.1} parent=16 // pred_check_branch
        %45 = sbr.rel (%p43) target = $region23
      $region22: #{tpu_custom_call.1} parent=16 // pred_region
        %s46 = sadd.s32 %s12, %s41
        %s47 = sld [smem:[#allocation4 + %s46]]
        %s48 = smul.addr %s47, 16
        %s49 = scalar_lea.hbm %s1, %s48
        %s50 = scalar_lea.vmem [#allocation5], %s41
        // Predicated region
        $region24: #{tpu_custom_call.1} parent=22 // pred_check
          _
        $region25: #{tpu_custom_call.1} parent=22 // pred_check_branch
          %52 = sbr.rel target = $region27
        $region26: #{tpu_custom_call.1} parent=22 // pred_region
          %53 = sst [smem:[#allocation9]] [#allocation12]
          %54 = sst [smem:[#allocation10]] [#allocation11]
        $region27: #{tpu_custom_call.1} parent=22 // pred_fallthru
          _
        %56 = shalt.err (0)
        %s58 = sshll.u32 %s50, 4
        %s59 = int_to_ptr.vmem [resolvable:$true] %s58
        %61 = dma.hbm_to_vmem [thread:$0]  %s49, 16, %s59, [#allocation2]
      $region23: #{tpu_custom_call.1} parent=16 // pred_fallthru
        _
      %s62 = sadd.s32 %s12, %s36
      %s63 = sld [smem:[#allocation4 + %s62]]
      %s64 = smul.u32 1, 1
      %s65 = sshll.u32 %s64, 4
      %66 = dma.done [#allocation2], %s65
    $region17: #{tpu_custom_call.1} parent=1 // loop_footer
      %s40 = sadd.s32 1, %s36
    $region18: #{tpu_custom_call.1} parent=1 // loop_footer_branch
      %35 = sbr.rel target = $region14
    $region19: #{tpu_custom_call.1} parent=1 // loop_exit
      _
    // Predicated region
    $region28: #{tpu_custom_call.1} parent=1 // pred_check
      _
    $region29: #{tpu_custom_call.1} parent=1 // pred_check_branch
      %68 = sbr.rel (0) target = $region31
    $region30: #{tpu_custom_call.1} parent=1 // pred_region
      %s70 = ssub.s32 256, 256
      %71 = vsyncadd [#allocation6], %s70
      %s72 = sshll.u32 [#allocation5], 4
      %s73 = int_to_ptr.vmem [resolvable:$true] %s72
      %78 = dma.vmem_to_hbm [thread:$0]  %s73, 256, %s2, [#allocation6], 128, 128, 8
    $region31: #{tpu_custom_call.1} parent=1 // pred_fallthru
      _
    // Predicated region
    $region32: #{tpu_custom_call.1} parent=1 // pred_check
      _
    $region33: #{tpu_custom_call.1} parent=1 // pred_check_branch
      %80 = sbr.rel (0) target = $region35
    $region34: #{tpu_custom_call.1} parent=1 // pred_region
      %81 = dma.done [#allocation6], 256
    $region35: #{tpu_custom_call.1} parent=1 // pred_fallthru
      _
    %82 = vsyncpa [#allocation6], 1
  %83 = vsyncmov [#allocation2]
  %s84 = vpop.sfrf %83
  %p85 = scmp.eq.s32.totalorder %s84, 0
  %p86 = pneg %p85
  %88 = shalt.err (%p86)

</llo_original>
